<compile_context>
chip_gen: v7x
topology: tpu7x:2x2x1
jax: 0.10.0
libtpu: 0.0.40
codegen_flags: <defaults>
</compile_context>

<pallas_src>
import numpy as np
import jax
import jax.numpy as jnp
from jax.experimental import pallas as pl
from jax.experimental.pallas import tpu as pltpu


def _build_pe_table(max_len: int, d_model: int) -> jnp.ndarray:
    """Deterministic sinusoidal table, identical to the PyTorch __init__."""
    position = np.arange(0, max_len, dtype=np.float32)[:, None]            # (L, 1)
    div_term = np.exp(
        np.arange(0, d_model, 2, dtype=np.float32) * (-np.log(10000.0) / d_model)
    )                                                                       # (D/2,)
    pe = np.zeros((max_len, d_model), dtype=np.float32)
    pe[:, 0::2] = np.sin(position * div_term)
    pe[:, 1::2] = np.cos(position * div_term)
    return jnp.asarray(pe)                                                  # (L, D) f32


# --------------------------------------------------------------------------- #
# Kernels
# --------------------------------------------------------------------------- #
def _pe_add_bcast_kernel(x_ref, pe_ref, o_ref):
    # x_ref / o_ref : (tile_s, B, D) in x dtype; pe_ref : (tile_s, D) f32.
    # Broadcast pe over the batch (sublane) axis; add in f32, cast on store.
    x = x_ref[...].astype(jnp.float32)
    o_ref[...] = (x + pe_ref[...][:, None, :]).astype(o_ref.dtype)


def _pe_add_flat_kernel(x_ref, pe_ref, o_ref):
    # x_ref / o_ref : (tile_s, B*D) in x dtype; pe_ref : (tile_s, B*D) f32.
    # Plain lane-dense elementwise add (small-D path, batch folded into lanes).
    o_ref[...] = (x_ref[...].astype(jnp.float32) + pe_ref[...]).astype(o_ref.dtype)


# --------------------------------------------------------------------------- #
# Tiling heuristics
# --------------------------------------------------------------------------- #
def _vmem_budget_bytes() -> int:
    """Generation-aware budget for the kernel's pipelined buffers."""
    try:
        cap = int(pltpu.get_tpu_info().vmem_capacity_bytes)
    except Exception:
        cap = 64 * 1024 * 1024          # conservative: v7x per-TC physical VMEM
    # Stay inside v5e's 16 MiB default scoped VMEM and <= 1/4 of physical
    # capacity on any generation (v7x has only 64 MiB per TensorCore).
    return min(cap // 4, 12 * 1024 * 1024)


def _pick_tile_s(S: int, row_bytes_io: int, row_bytes_pe: int, sublane: int) -> int:
    """Sequence rows per block.

    VMEM/step ~= double-buffered (x + out + pe) = (4*row_io + 2*row_pe)*tile_s.
    Target ~2 MiB per x/out buffer (>=85% of HBM roofline at that size) while
    keeping >=4 grid steps whenever S allows, so the BlockSpec double-buffer
    actually overlaps DMA with the VPU add.
    """
    budget = _vmem_budget_bytes()
    per_row = 4 * row_bytes_io + 2 * row_bytes_pe
    rows_vmem = max(sublane, budget // per_row)
    rows_target = max(sublane, (2 * 1024 * 1024) // max(1, row_bytes_io))
    tile = min(rows_vmem, rows_target)
    min_steps = 4
    if S >= min_steps * sublane:
        tile = min(tile, max(sublane, S // min_steps))
    tile = max(sublane, (tile // sublane) * sublane)
    return S if tile >= S else tile


def _vmem_limit_bytes(tile_s: int, row_bytes_io: int, row_bytes_pe: int) -> int:
    footprint = tile_s * (4 * row_bytes_io + 2 * row_bytes_pe)
    return int(min(max(2 * footprint, 4 * 1024 * 1024), 64 * 1024 * 1024))


# --------------------------------------------------------------------------- #
# Wrapper
# --------------------------------------------------------------------------- #
def positional_encoding_forward(x: jnp.ndarray, pe_full: jnp.ndarray) -> jnp.ndarray:
    """x: (S, B, D); pe_full: (max_len, D) float32. Returns x + pe[:S] (eval-mode)."""
    S, B, D = x.shape
    pe = pe_full[:S, :]                      # (S, D) f32; add in f32, cast on store
    itemsize = x.dtype.itemsize
    sublane = 8 * max(1, 4 // itemsize)      # 8 rows f32 / 16 rows bf16

    if D < 128:
        # Lane-dense small-D path: fold batch into the lane axis so stores are
        # unmasked (D=32 alone would use only 25% of each vreg's 128 lanes).
        x_flat = x.reshape(S, B * D)                      # contiguous, free view
        pe_flat = jnp.tile(pe, (1, B))                    # (S, B*D) f32: pe[s, k % D]
        row_io, row_pe = B * D * itemsize, B * D * 4
        tile_s = _pick_tile_s(S, row_io, row_pe, sublane)
        num_tiles = pl.cdiv(S, tile_s)
        out_flat = pl.pallas_call(
            _pe_add_flat_kernel,
            out_shape=jax.ShapeDtypeStruct((S, B * D), x.dtype),
            grid_spec=pl.GridSpec(
                grid=(num_tiles,),
                in_specs=[
                    pl.BlockSpec((tile_s, B * D), lambda si: (si, 0)),
                    pl.BlockSpec((tile_s, B * D), lambda si: (si, 0)),
                ],
                out_specs=pl.BlockSpec((tile_s, B * D), lambda si: (si, 0)),
            ),
            cost_estimate=pl.CostEstimate(
                flops=S * B * D,
                transcendentals=0,
                bytes_accessed=2 * S * B * D * itemsize + S * B * D * 4,
            ),
            compiler_params=pltpu.CompilerParams(
                dimension_semantics=("parallel",),
                vmem_limit_bytes=_vmem_limit_bytes(tile_s, row_io, row_pe),
            ),
        )(x_flat, pe_flat)
        return out_flat.reshape(S, B, D)

    # General path (D >= 128): native (S, B, D) layout, pe broadcast over batch
    # inside the kernel. Last two block dims are (B, D) = full extents, so the
    # (8, 128) rule is satisfied for any B.
    row_io, row_pe = B * D * itemsize, D * 4
    tile_s = _pick_tile_s(S, row_io, row_pe, sublane)
    num_tiles = pl.cdiv(S, tile_s)
    return pl.pallas_call(
        _pe_add_bcast_kernel,
        out_shape=jax.ShapeDtypeStruct((S, B, D), x.dtype),
        grid_spec=pl.GridSpec(
            grid=(num_tiles,),
            in_specs=[
                pl.BlockSpec((tile_s, B, D), lambda si: (si, 0, 0)),
                pl.BlockSpec((tile_s, D), lambda si: (si, 0)),
            ],
            out_specs=pl.BlockSpec((tile_s, B, D), lambda si: (si, 0, 0)),
        ),
        cost_estimate=pl.CostEstimate(
            flops=S * B * D,
            transcendentals=0,
            bytes_accessed=2 * S * B * D * itemsize + S * D * 4,
        ),
        compiler_params=pltpu.CompilerParams(
            dimension_semantics=("parallel",),
            vmem_limit_bytes=_vmem_limit_bytes(tile_s, row_io, row_pe),
        ),
    )(x, pe)


if __name__ == "__main__":
    key = jax.random.PRNGKey(0)
    k1, k2 = jax.random.split(key)
    fwd = jax.jit(positional_encoding_forward)

    # 1) Small-D path (batch folded into lanes): seq=8, batch=2, d_model=32.
    S, B, D, max_len = 8, 2, 32, 64
    x = jax.random.normal(k1, (S, B, D), dtype=jnp.float32)
    pe_full = _build_pe_table(max_len, D)
    out = jax.block_until_ready(fwd(x, pe_full))
    ref = x + pe_full[:S, :][:, None, :]
    np.testing.assert_allclose(np.asarray(out), np.asarray(ref),
                               rtol=1e-6, atol=1e-6)

    # 2) Lane-full path (D >= 128, in-kernel batch broadcast): seq=16, d_model=128.
    S2, B2, D2 = 16, 2, 128
    x2 = jax.random.normal(k2, (S2, B2, D2), dtype=jnp.float32)
    pe_full2 = _build_pe_table(max_len, D2)
    out2 = jax.block_until_ready(fwd(x2, pe_full2))
    ref2 = x2 + pe_full2[:S2, :][:, None, :]
    np.testing.assert_allclose(np.asarray(out2), np.asarray(ref2),
                               rtol=1e-6, atol=1e-6)

    print("KERNEL_OK")
</pallas_src>

<mosaic_0001>
module attributes {stable_mosaic.version = 11 : i64} {
  func.func @_pe_add_flat_kernel(%arg0: i32, %arg1: memref<8x64xf32, #tpu.memory_space<vmem>>, %arg2: memref<8x64xf32, #tpu.memory_space<vmem>>, %arg3: memref<8x64xf32, #tpu.memory_space<vmem>>) attributes {dimension_semantics = [#tpu.dimension_semantics<parallel>], iteration_bounds = array<i64: 1>, scalar_prefetch = 0 : i64, scratch_operands = 0 : i64, tpu.core_type = #tpu.core_type<tc>, window_params = [{transform_indices = @transform_0, window_bounds = array<i64: 8, 64>}, {transform_indices = @transform_1, window_bounds = array<i64: 8, 64>}, {transform_indices = @transform_2, window_bounds = array<i64: 8, 64>}]} {
    %c0 = arith.constant 0 : index
    %c0_0 = arith.constant 0 : index
    %0 = vector.load %arg1[%c0, %c0_0] : memref<8x64xf32, #tpu.memory_space<vmem>>, vector<8x64xf32>
    %c0_1 = arith.constant 0 : index
    %c0_2 = arith.constant 0 : index
    %1 = vector.load %arg2[%c0_1, %c0_2] : memref<8x64xf32, #tpu.memory_space<vmem>>, vector<8x64xf32>
    %2 = arith.addf %0, %1 : vector<8x64xf32>
    %c0_3 = arith.constant 0 : index
    %c0_4 = arith.constant 0 : index
    %3 = vector.load %arg3[%c0_3, %c0_4] : memref<8x64xf32, #tpu.memory_space<vmem>>, vector<8x64xf32>
    tpu.vector_store %arg3[%c0_3, %c0_4], %2 {strides = array<i32>} : memref<8x64xf32, #tpu.memory_space<vmem>>, vector<8x64xf32>,
    return
  }
  func.func @transform_0(%arg0: i32) -> (i32, i32) {
    %c0_i32 = arith.constant 0 : i32
    %c0_i32_0 = arith.constant 0 : i32
    return %arg0, %c0_i32 : i32, i32
  }
  func.func @transform_1(%arg0: i32) -> (i32, i32) {
    %c0_i32 = arith.constant 0 : i32
    %c0_i32_0 = arith.constant 0 : i32
    return %arg0, %c0_i32 : i32, i32
  }
  func.func @transform_2(%arg0: i32) -> (i32, i32) {
    %c0_i32 = arith.constant 0 : i32
    %c0_i32_0 = arith.constant 0 : i32
    return %arg0, %c0_i32 : i32, i32
  }
}

</mosaic_0001>

<llo_original>
// kernel: tile.9
$region0: #{tile.9}
  %s0 = inlined_call_operand.vmem [shape: f32[8,2,32], index: 0, kind: input, shape index: {}]
  %s1 = inlined_call_operand.vmem [shape: f32[8,64], index: 1, kind: output, shape index: {}]
  $region1: #{tile.9} parent=0
    #allocation0 [shape = 'u8[32768]{0}', space=vmem, size = 0x8000, scoped, tag = 'scoped mem for input reshape']
    %s3 = sshllo.u32 0, 2
    %s4 = smul.addr 2, 7
    %s5 = scalar_lea.vmem %s0, %s4
    %v6 = vld [vmem:[%s5] sm:%s3]
    %s7 = scalar_lea.vmem [#allocation0], 56
    %8 = vst [vmem:[%s7] sm:%s3] %v6
    %s9 = smul.addr 2, 6
    %s10 = scalar_lea.vmem %s0, %s9
    %v11 = vld [vmem:[%s10] sm:%s3]
    %s12 = scalar_lea.vmem [#allocation0], 48
    %13 = vst [vmem:[%s12] sm:%s3] %v11
    %s14 = smul.addr 2, 5
    %s15 = scalar_lea.vmem %s0, %s14
    %v16 = vld [vmem:[%s15] sm:%s3]
    %s17 = scalar_lea.vmem [#allocation0], 40
    %18 = vst [vmem:[%s17] sm:%s3] %v16
    %s19 = smul.addr 2, 4
    %s20 = scalar_lea.vmem %s0, %s19
    %v21 = vld [vmem:[%s20] sm:%s3]
    %s22 = scalar_lea.vmem [#allocation0], 32
    %23 = vst [vmem:[%s22] sm:%s3] %v21
    %s24 = smul.addr 2, 3
    %s25 = scalar_lea.vmem %s0, %s24
    %v26 = vld [vmem:[%s25] sm:%s3]
    %s27 = scalar_lea.vmem [#allocation0], 24
    %28 = vst [vmem:[%s27] sm:%s3] %v26
    %s29 = smul.addr 2, 2
    %s30 = scalar_lea.vmem %s0, %s29
    %v31 = vld [vmem:[%s30] sm:%s3]
    %s32 = scalar_lea.vmem [#allocation0], 16
    %33 = vst [vmem:[%s32] sm:%s3] %v31
    %s34 = scalar_lea.vmem %s0, 2
    %v35 = vld [vmem:[%s34] sm:%s3]
    %s36 = scalar_lea.vmem [#allocation0], 8
    %37 = vst [vmem:[%s36] sm:%s3] %v35
    %v38 = vld [vmem:[%s0] sm:%s3]
    %39 = vst [vmem:[#allocation0] sm:%s3] %v38
    %v40 = vld [vmem:[#allocation0] ss:$8 sm:$0xf]
    %v41 = vld [vmem:[#allocation0] ss:$8 sm:$0xf0]
    %vm42 = vcmask 1047556
    %v43 = vsel %vm42, %v41, %v40
    %vm44 = vcmask 261120
    %45 = vst.msk [vmem:[%s1] sm:$0xff] %vm44, %v43
    %s46 = scalar_lea.vmem [#allocation0], 1
    %v47 = vld [vmem:[%s46] ss:$8 sm:$0xf]
    %s48 = scalar_lea.vmem [#allocation0], 1
    %v49 = vld [vmem:[%s48] ss:$8 sm:$0xf0]
    %vm50 = vcmask 1047556
    %v51 = vsel %vm50, %v49, %v47
    %52 = vrot.lane.b32.xlu0 %v51, 32
    %v53 = vpop.permute.xlu0 %52
    %vm54 = vcmask 523520
    %55 = vst.msk [vmem:[%s1] sm:$0xff] %vm54, %v53

// kernel: positional_encoding_forward.1
$region0: #{positional_encoding_forward.1}
  #allocation0 [shape = 'u32[]', space=smem, size = 0x4, offset = 0x4, fixed_abs, tag = 'smem constant byte address 0x4 - core index']
  #allocation1 [shape = 'u32[144,128]{1,0:T(1,128)}', space=vmem, size = 0x12000, scoped, tag = 'internal scratch']
  %s0 = inlined_call_operand.vmem [shape: f32[8,64], index: 0, kind: input, shape index: {}]
  %s1 = inlined_call_operand.vmem [shape: f32[8,64], index: 1, kind: input, shape index: {}]
  %s2 = inlined_call_operand.vmem [shape: f32[8,64], index: 2, kind: output, shape index: {}]
  %s3 = sld [smem:[#allocation0]]
  $region18: #{positional_encoding_forward.1} parent=0
    _
  %s5 = ssub.s32 1, %s3
  %s6 = scalar_select 0, %s5, %s3
  // Predicated region
  $region2: #{positional_encoding_forward.1} parent=0 // pred_check
    _
  $region3: #{positional_encoding_forward.1} parent=0 // pred_check_branch
    %8 = sbr.rel (0) target = $region5
  $region4: #{positional_encoding_forward.1} parent=0 // pred_region
    _
  $region5: #{positional_encoding_forward.1} parent=0 // pred_fallthru
    _
  // Predicated region
  $region6: #{positional_encoding_forward.1} parent=0 // pred_check
    _
  $region7: #{positional_encoding_forward.1} parent=0 // pred_check_branch
    %10 = sbr.rel (0) target = $region9
  $region8: #{positional_encoding_forward.1} parent=0 // pred_region
    _
  $region9: #{positional_encoding_forward.1} parent=0 // pred_fallthru
    _
  %v11 = vld [vmem:[%s0] sm:$0xff]
  %v12 = vld [vmem:[%s1] sm:$0xff]
  %v13 = vadd.f32 %v11, %v12
  %vm14 = vcmask 523264
  %15 = vst.msk [vmem:[%s2] sm:$0xff] %vm14, %v13
  // Predicated region
  $region10: #{positional_encoding_forward.1} parent=0 // pred_check
    _
  $region11: #{positional_encoding_forward.1} parent=0 // pred_check_branch
    %17 = sbr.rel (0) target = $region13
  $region12: #{positional_encoding_forward.1} parent=0 // pred_region
    _
  $region13: #{positional_encoding_forward.1} parent=0 // pred_fallthru
    _
  // Predicated region
  $region14: #{positional_encoding_forward.1} parent=0 // pred_check
    _
  $region15: #{positional_encoding_forward.1} parent=0 // pred_check_branch
    %19 = sbr.rel (0) target = $region17
  $region16: #{positional_encoding_forward.1} parent=0 // pred_region
    _
  $region17: #{positional_encoding_forward.1} parent=0 // pred_fallthru
    _

</llo_original>
